<compile_context>
chip_gen: v6e
topology: v6e:2x2x1
jax: 0.10.0
libtpu: 0.0.40
codegen_flags: <defaults>
</compile_context>

<pallas_src>
from functools import partial

import jax
import jax.numpy as jnp
from jax import lax
from jax.experimental import pallas as pl
from jax.experimental.pallas import tpu as pltpu

STATE_SIZE = 4
ACTION_SIZE = 2
FC1_DIMS = 128
FC2_DIMS = 64
LANES = 128

STATE_PAD = 8      # x^T rows: 4 features + 1 ones-row (bias augmentation) + 3 zero
ACT_PAD = 8        # out^T rows: 2 actions + 6 zero (one f32 sublane tile)
W3T_ROWS = 16      # stored w3^T rows (one full bf16 sublane tile)


def _round_up(n, m):
    return (n + m - 1) // m * m


# ----------------------------------------------------------------------------- kernel
def dqn_kernel(xt_ref, w2t_ref, w3t_ref, w1ta_ref, b2_ref, b3_ref, out_ref, *, sub):
    tb = out_ref.shape[-1]            # static block width (lanes = batch)
    n_sub = tb // sub

    # Small resident params loaded once per grid step (<= 1-2 vregs each).
    w1ta = w1ta_ref[...]              # (128, 8)  f32; lane STATE_SIZE holds b1
    w3t = w3t_ref[...]                # (16, 128) bf16; rows >= 2 / lanes >= 64 zero
    b2 = b2_ref[...]                  # (128, 1)  f32; rows >= 64 zero
    b3 = b3_ref[...]                  # (8, 1)    f32; rows >= 2 zero

    def body(j, carry):
        c = pl.multiple_of(j * sub, sub)
        xt = xt_ref[:, pl.ds(c, sub)]                       # (8, sub) f32; row 4 == 1.0

        # fc1 (+ bias via ones-row augmentation) on the MXU, f32: (128,8)@(8,sub)
        h1 = jnp.maximum(
            jnp.dot(w1ta, xt, preferred_element_type=jnp.float32), 0.0)

        # fc2: VMEM-resident bf16 weights, f32 accumulation; padded rows stay 0.
        h2 = jnp.dot(w2t_ref[...], h1.astype(jnp.bfloat16),
                     preferred_element_type=jnp.float32)
        h2 = jnp.maximum(h2 + b2, 0.0)                      # (128, sub)

        # fc3: (16,128)@(128,sub) -> keep first 8 rows; rows 2..7 stay exactly 0.
        o = jnp.dot(w3t, h2.astype(jnp.bfloat16),
                    preferred_element_type=jnp.float32)
        out_ref[:, pl.ds(c, sub)] = o[:ACT_PAD, :] + b3     # lane-dense store
        return carry

    lax.fori_loop(0, n_sub, body, 0, unroll=n_sub <= 8)


# ----------------------------------------------------------------------------- packing
def pack_params(w1, b1, w2, b2, w3, b3):
    """Pre-pack parameters (stored (in, out)) for the transposed kernel.

    Returns (w2t_bf16, w3t_bf16, w1ta_f32, b2col_f32, b3col_f32).
    """
    w1 = jnp.asarray(w1, jnp.float32)
    w2 = jnp.asarray(w2, jnp.float32)
    w3 = jnp.asarray(w3, jnp.float32)
    b1 = jnp.asarray(b1, jnp.float32).reshape(-1)
    b2 = jnp.asarray(b2, jnp.float32).reshape(-1)
    b3 = jnp.asarray(b3, jnp.float32).reshape(-1)

    # fc1: [w1 | b1]^T augmented -- bias folded via the constant-one row of x^T.
    w1ta = jnp.zeros((FC1_DIMS, STATE_PAD), jnp.float32)
    w1ta = w1ta.at[:, :STATE_SIZE].set(w1.T)
    w1ta = w1ta.at[:, STATE_SIZE].set(b1)

    # fc2: w2^T, out-feature rows padded 64 -> 128 with zeros, bf16.
    w2t = jnp.zeros((FC1_DIMS, FC1_DIMS), jnp.float32).at[:FC2_DIMS, :].set(w2.T)
    w2t = w2t.astype(jnp.bfloat16)
    b2c = jnp.zeros((FC1_DIMS, 1), jnp.float32).at[:FC2_DIMS, 0].set(b2)

    # fc3: w3^T, rows padded 2 -> 16 (bf16 sublane tile), cols padded 64 -> 128.
    w3t = jnp.zeros((W3T_ROWS, FC1_DIMS), jnp.float32).at[:ACTION_SIZE, :FC2_DIMS].set(w3.T)
    w3t = w3t.astype(jnp.bfloat16)
    b3c = jnp.zeros((ACT_PAD, 1), jnp.float32).at[:ACTION_SIZE, 0].set(b3)

    return w2t, w3t, w1ta, b2c, b3c


# ----------------------------------------------------------------------------- wrapper
def dqn_forward(x, packed, *, block_b=1024, sub_b=256):
    """y = fc3(relu(fc2(relu(fc1(x)))))  -- x: (B, 4) f32, returns (B, 2) f32."""
    w2t, w3t, w1ta, b2c, b3c = packed
    B = x.shape[0]

    # Batch tile (lanes): multiple of 128, large to amortize per-step overhead,
    # but >= 2 grid steps whenever the padded batch allows (v7x megacore).
    bp = _round_up(B, LANES)
    tb = min(block_b, bp)
    if bp >= 2 * LANES:
        tb = min(tb, _round_up(bp // 2, LANES))
    tb = _round_up(max(tb, LANES), LANES)
    bp = _round_up(bp, tb)
    sub = sub_b if (sub_b <= tb and tb % sub_b == 0) else LANES

    # x^T: (8, bp), features on sublanes, batch on lanes; row 4 = 1.0 (bias aug).
    xt = jnp.zeros((STATE_PAD, bp), jnp.float32)
    xt = xt.at[:STATE_SIZE, :B].set(jnp.asarray(x, jnp.float32).T)
    xt = xt.at[STATE_SIZE, :].set(1.0)

    flops = 2 * bp * (STATE_SIZE * FC1_DIMS + FC1_DIMS * FC2_DIMS
                      + FC2_DIMS * ACTION_SIZE)
    bytes_accessed = (xt.size * 4 + w2t.size * 2 + w3t.size * 2
                      + w1ta.size * 4 + b2c.size * 4 + b3c.size * 4
                      + ACT_PAD * bp * 4)

    out_t = pl.pallas_call(
        partial(dqn_kernel, sub=sub),
        out_shape=jax.ShapeDtypeStruct((ACT_PAD, bp), jnp.float32),
        grid_spec=pltpu.PrefetchScalarGridSpec(
            num_scalar_prefetch=0,
            grid=(bp // tb,),
            in_specs=[
                pl.BlockSpec((STATE_PAD, tb), lambda i: (0, i)),         # x^T tile
                pl.BlockSpec((FC1_DIMS, LANES), lambda i: (0, 0)),       # w2^T (resident)
                pl.BlockSpec((W3T_ROWS, LANES), lambda i: (0, 0)),       # w3^T (resident)
                pl.BlockSpec((FC1_DIMS, STATE_PAD), lambda i: (0, 0)),   # [w1|b1]^T (resident)
                pl.BlockSpec((FC1_DIMS, 1), lambda i: (0, 0)),           # b2 col (resident)
                pl.BlockSpec((ACT_PAD, 1), lambda i: (0, 0)),            # b3 col (resident)
            ],
            out_specs=pl.BlockSpec((ACT_PAD, tb), lambda i: (0, i)),     # lane-dense out^T
        ),
        compiler_params=pltpu.CompilerParams(
            dimension_semantics=("parallel",),
            vmem_limit_bytes=32 * 1024 * 1024,
        ),
        cost_estimate=pl.CostEstimate(
            flops=flops, transcendentals=0, bytes_accessed=bytes_accessed),
    )(xt, w2t, w3t, w1ta, b2c, b3c)

    return out_t[:ACTION_SIZE, :B].T


# ----------------------------------------------------------------------------- reference
def init_params(key):
    """Deterministic init mirroring torch.nn.Linear default (U[-1/sqrt(fan_in), +])."""
    def linear(key, fan_in, fan_out):
        kw, kb = jax.random.split(key)
        bound = 1.0 / jnp.sqrt(float(fan_in))
        w = jax.random.uniform(kw, (fan_in, fan_out), jnp.float32, -bound, bound)
        b = jax.random.uniform(kb, (1, fan_out), jnp.float32, -bound, bound)
        return w, b

    k1, k2, k3 = jax.random.split(key, 3)
    w1, b1 = linear(k1, STATE_SIZE, FC1_DIMS)
    w2, b2 = linear(k2, FC1_DIMS, FC2_DIMS)
    w3, b3 = linear(k3, FC2_DIMS, ACTION_SIZE)
    return (w1, b1, w2, b2, w3, b3)


def reference_forward(x, params):
    """Pure-JAX reference of the module in full f32."""
    w1, b1, w2, b2, w3, b3 = params
    hp = jax.lax.Precision.HIGHEST
    h1 = jnp.maximum(jnp.dot(x, w1, precision=hp) + b1, 0.0)
    h2 = jnp.maximum(jnp.dot(h1, w2, precision=hp) + b2, 0.0)
    return jnp.dot(h2, w3, precision=hp) + b3


def reference_forward_bf16(x, params):
    """Reference matching the kernel numerics: f32 fc1, bf16-in/f32-acc fc2+fc3."""
    w1, b1, w2, b2, w3, b3 = params
    hp = jax.lax.Precision.HIGHEST
    h1 = jnp.maximum(jnp.dot(x, w1, precision=hp) + b1, 0.0)
    h2 = jnp.dot(h1.astype(jnp.bfloat16), w2.astype(jnp.bfloat16),
                 preferred_element_type=jnp.float32)
    h2 = jnp.maximum(h2 + b2, 0.0)
    out = jnp.dot(h2.astype(jnp.bfloat16), w3.astype(jnp.bfloat16),
                  preferred_element_type=jnp.float32)
    return out + b3


# ----------------------------------------------------------------------------- main
if __name__ == "__main__":
    key = jax.random.PRNGKey(0)
    k_params, k_x1, k_x2, k_x3 = jax.random.split(key, 4)

    params = init_params(k_params)
    packed = pack_params(*params)

    cases = (
        ("inference", 8, k_x1),      # single grid step, single sub-tile
        ("train", 300, k_x2),        # padding path, 2 grid steps (tb=256)
        ("big", 1024, k_x3),         # 2 grid steps of tb=512, 2 inner sub-tiles
    )
    for name, bsz, kx in cases:
        x = jax.random.normal(kx, (bsz, STATE_SIZE), jnp.float32)
        out = jax.block_until_ready(dqn_forward(x, packed))
        assert out.shape == (bsz, ACTION_SIZE), (name, out.shape)

        ref_match = reference_forward_bf16(x, params)    # same numerics as kernel
        ref_full = reference_forward(x, params)          # true f32 module output
        err_m = float(jnp.max(jnp.abs(out - ref_match)))
        err_f = float(jnp.max(jnp.abs(out - ref_full)))
        assert jnp.allclose(out, ref_match, atol=2e-3, rtol=2e-3), (name, err_m)
        assert jnp.allclose(out, ref_full, atol=5e-2, rtol=5e-2), (name, err_f)

    print("KERNEL_OK")
</pallas_src>

<mosaic_0001>
module attributes {stable_mosaic.version = 11 : i64} {
  func.func @dqn_kernel(%arg0: i32, %arg1: memref<8x128xf32, #tpu.memory_space<vmem>>, %arg2: memref<128x128xbf16, #tpu.memory_space<vmem>>, %arg3: memref<16x128xbf16, #tpu.memory_space<vmem>>, %arg4: memref<128x8xf32, #tpu.memory_space<vmem>>, %arg5: memref<128x1xf32, #tpu.memory_space<vmem>>, %arg6: memref<8x1xf32, #tpu.memory_space<vmem>>, %arg7: memref<8x128xf32, #tpu.memory_space<vmem>>) attributes {dimension_semantics = [#tpu.dimension_semantics<parallel>], iteration_bounds = array<i64: 1>, scalar_prefetch = 0 : i64, scratch_operands = 0 : i64, tpu.core_type = #tpu.core_type<tc>, window_params = [{transform_indices = @transform_0, window_bounds = array<i64: 8, 128>}, {pipeline_mode = #tpu.pipeline_mode<synchronous>, transform_indices = @transform_1, window_bounds = array<i64: 128, 128>}, {pipeline_mode = #tpu.pipeline_mode<synchronous>, transform_indices = @transform_2, window_bounds = array<i64: 16, 128>}, {pipeline_mode = #tpu.pipeline_mode<synchronous>, transform_indices = @transform_3, window_bounds = array<i64: 128, 8>}, {pipeline_mode = #tpu.pipeline_mode<synchronous>, transform_indices = @transform_4, window_bounds = array<i64: 128, 1>}, {pipeline_mode = #tpu.pipeline_mode<synchronous>, transform_indices = @transform_5, window_bounds = array<i64: 8, 1>}, {transform_indices = @transform_6, window_bounds = array<i64: 8, 128>}]} {
    %c0 = arith.constant 0 : index
    %c0_0 = arith.constant 0 : index
    %0 = vector.load %arg4[%c0, %c0_0] : memref<128x8xf32, #tpu.memory_space<vmem>>, vector<128x8xf32>
    %c0_1 = arith.constant 0 : index
    %c0_2 = arith.constant 0 : index
    %1 = vector.load %arg3[%c0_1, %c0_2] : memref<16x128xbf16, #tpu.memory_space<vmem>>, vector<16x128xbf16>
    %c0_3 = arith.constant 0 : index
    %c0_4 = arith.constant 0 : index
    %2 = vector.load %arg5[%c0_3, %c0_4] : memref<128x1xf32, #tpu.memory_space<vmem>>, vector<128x1xf32>
    %c0_5 = arith.constant 0 : index
    %c0_6 = arith.constant 0 : index
    %3 = vector.load %arg6[%c0_5, %c0_6] : memref<8x1xf32, #tpu.memory_space<vmem>>, vector<8x1xf32>
    %c0_i32 = arith.constant 0 : i32
    %c128_i32 = arith.constant 128 : i32
    %4 = arith.muli %c0_i32, %c128_i32 : i32
    %5 = tpu.assume_multiple %4, 128 : i32
    %c0_7 = arith.constant 0 : index
    %6 = arith.index_cast %5 : i32 to index
    %7 = vector.load %arg1[%c0_7, %6] : memref<8x128xf32, #tpu.memory_space<vmem>>, vector<8x128xf32>
    %cst = arith.constant dense<0.000000e+00> : vector<128x128xf32>
    %8 = tpu.matmul %0, %7, %cst {dimension_numbers = #tpu.dot_dimension_numbers<[1], [0], [0], [1], [0, 0, 1, 1], [], []>} : vector<128x8xf32>, vector<8x128xf32>, vector<128x128xf32> -> vector<128x128xf32>
    %cst_8 = arith.constant 0.000000e+00 : f32
    %9 = vector.broadcast %cst_8 : f32 to vector<128x128xf32>
    %10 = arith.maximumf %8, %9 : vector<128x128xf32>
    %c0_9 = arith.constant 0 : index
    %c0_10 = arith.constant 0 : index
    %11 = vector.load %arg2[%c0_9, %c0_10] : memref<128x128xbf16, #tpu.memory_space<vmem>>, vector<128x128xbf16>
    %12 = arith.truncf %10 : vector<128x128xf32> to vector<128x128xbf16>
    %cst_11 = arith.constant dense<0.000000e+00> : vector<128x128xf32>
    %13 = tpu.matmul %11, %12, %cst_11 {dimension_numbers = #tpu.dot_dimension_numbers<[1], [0], [0], [1], [0, 0, 1, 1], [], []>} : vector<128x128xbf16>, vector<128x128xbf16>, vector<128x128xf32> -> vector<128x128xf32>
    %14 = vector.broadcast %2 : vector<128x1xf32> to vector<128x128xf32>
    %15 = arith.addf %13, %14 : vector<128x128xf32>
    %cst_12 = arith.constant 0.000000e+00 : f32
    %16 = vector.broadcast %cst_12 : f32 to vector<128x128xf32>
    %17 = arith.maximumf %15, %16 : vector<128x128xf32>
    %18 = arith.truncf %17 : vector<128x128xf32> to vector<128x128xbf16>
    %cst_13 = arith.constant dense<0.000000e+00> : vector<16x128xf32>
    %19 = tpu.matmul %1, %18, %cst_13 {dimension_numbers = #tpu.dot_dimension_numbers<[1], [0], [0], [1], [0, 0, 1, 1], [], []>} : vector<16x128xbf16>, vector<128x128xbf16>, vector<16x128xf32> -> vector<16x128xf32>
    %20 = vector.extract_strided_slice %19 {offsets = [0, 0], sizes = [8, 128], strides = [1, 1]} : vector<16x128xf32> to vector<8x128xf32>
    %21 = vector.broadcast %3 : vector<8x1xf32> to vector<8x128xf32>
    %22 = arith.addf %20, %21 : vector<8x128xf32>
    %c0_14 = arith.constant 0 : index
    %23 = arith.index_cast %5 : i32 to index
    %24 = vector.load %arg7[%c0_14, %23] : memref<8x128xf32, #tpu.memory_space<vmem>>, vector<8x128xf32>
    tpu.vector_store %arg7[%c0_14, %23], %22 {strides = array<i32>} : memref<8x128xf32, #tpu.memory_space<vmem>>, vector<8x128xf32>,
    %c1_i32 = arith.constant 1 : i32
    return
  }
  func.func @transform_0(%arg0: i32) -> (i32, i32) {
    %c0_i32 = arith.constant 0 : i32
    %c0_i32_0 = arith.constant 0 : i32
    return %c0_i32, %arg0 : i32, i32
  }
  func.func @transform_1(%arg0: i32) -> (i32, i32) {
    %c0_i32 = arith.constant 0 : i32
    %c0_i32_0 = arith.constant 0 : i32
    %c0_i32_1 = arith.constant 0 : i32
    return %c0_i32, %c0_i32_0 : i32, i32
  }
  func.func @transform_2(%arg0: i32) -> (i32, i32) {
    %c0_i32 = arith.constant 0 : i32
    %c0_i32_0 = arith.constant 0 : i32
    %c0_i32_1 = arith.constant 0 : i32
    return %c0_i32, %c0_i32_0 : i32, i32
  }
  func.func @transform_3(%arg0: i32) -> (i32, i32) {
    %c0_i32 = arith.constant 0 : i32
    %c0_i32_0 = arith.constant 0 : i32
    %c0_i32_1 = arith.constant 0 : i32
    return %c0_i32, %c0_i32_0 : i32, i32
  }
  func.func @transform_4(%arg0: i32) -> (i32, i32) {
    %c0_i32 = arith.constant 0 : i32
    %c0_i32_0 = arith.constant 0 : i32
    %c0_i32_1 = arith.constant 0 : i32
    return %c0_i32, %c0_i32_0 : i32, i32
  }
  func.func @transform_5(%arg0: i32) -> (i32, i32) {
    %c0_i32 = arith.constant 0 : i32
    %c0_i32_0 = arith.constant 0 : i32
    %c0_i32_1 = arith.constant 0 : i32
    return %c0_i32, %c0_i32_0 : i32, i32
  }
  func.func @transform_6(%arg0: i32) -> (i32, i32) {
    %c0_i32 = arith.constant 0 : i32
    %c0_i32_0 = arith.constant 0 : i32
    return %c0_i32, %arg0 : i32, i32
  }
}

</mosaic_0001>

<llo_original>
// kernel: tpu_custom_call.1
$region0: #{tpu_custom_call.1}
  #allocation0 [shape = 'u32[]', space=smem, size = 0x4, offset = 0x4, fixed_abs, tag = 'smem constant byte address 0x4 - core index']
  #allocation1 [shape = 'u32[144,128]{1,0:T(1,128)}', space=vmem, size = 0x12000, scoped, tag = 'internal scratch']
  %s0 = inlined_call_operand.vmem [shape: f32[8,128], index: 0, kind: input, shape index: {}]
  %s1 = inlined_call_operand.vmem [shape: bf16[128,128], index: 1, kind: input, shape index: {}]
  %s2 = inlined_call_operand.vmem [shape: bf16[16,128], index: 2, kind: input, shape index: {}]
  %s3 = inlined_call_operand.vmem [shape: f32[128,8], index: 3, kind: input, shape index: {}]
  %s4 = inlined_call_operand.vmem [shape: f32[128,1], index: 4, kind: input, shape index: {}]
  %s5 = inlined_call_operand.vmem [shape: f32[8,1], index: 5, kind: input, shape index: {}]
  %s6 = inlined_call_operand.hbm [shape: f32[8,128], index: 6, kind: output, shape index: {}]
  %s7 = sld [smem:[#allocation0]]
  $region34: #{tpu_custom_call.1} parent=0
    _
  %s9 = ssub.s32 1, %s7
  %s10 = scalar_select 0, %s9, %s7
  $region1: #{tpu_custom_call.1} parent=0
    #allocation2 [shape = 'u8[4096]{0}', space=vmem, size = 0x1000, scoped, tag = 'output window, operand 0, single buffered']
    #allocation3 [shape = 's32[1]{0}', space=sflag, size = 0x4, scoped, tag = 'scoped memory for tpu_custom_call.1']
    %11 = vsyncpa [#allocation3], 0
    // Predicated region
    $region2: #{tpu_custom_call.1} parent=1 // pred_check
      _
    $region3: #{tpu_custom_call.1} parent=1 // pred_check_branch
      %13 = sbr.rel (0) target = $region5
    $region4: #{tpu_custom_call.1} parent=1 // pred_region
      _
    $region5: #{tpu_custom_call.1} parent=1 // pred_fallthru
      _
    // Predicated region
    $region6: #{tpu_custom_call.1} parent=1 // pred_check
      _
    $region7: #{tpu_custom_call.1} parent=1 // pred_check_branch
      %15 = sbr.rel (0) target = $region9
    $region8: #{tpu_custom_call.1} parent=1 // pred_region
      _
    $region9: #{tpu_custom_call.1} parent=1 // pred_fallthru
      _
    // Predicated region
    $region10: #{tpu_custom_call.1} parent=1 // pred_check
      _
    $region11: #{tpu_custom_call.1} parent=1 // pred_check_branch
      %17 = sbr.rel (0) target = $region13
    $region12: #{tpu_custom_call.1} parent=1 // pred_region
      _
    $region13: #{tpu_custom_call.1} parent=1 // pred_fallthru
      _
    // Predicated region
    $region14: #{tpu_custom_call.1} parent=1 // pred_check
      _
    $region15: #{tpu_custom_call.1} parent=1 // pred_check_branch
      %19 = sbr.rel (0) target = $region17
    $region16: #{tpu_custom_call.1} parent=1 // pred_region
      _
    $region17: #{tpu_custom_call.1} parent=1 // pred_fallthru
      _
    // Predicated region
    $region18: #{tpu_custom_call.1} parent=1 // pred_check
      _
    $region19: #{tpu_custom_call.1} parent=1 // pred_check_branch
      %21 = sbr.rel (0) target = $region21
    $region20: #{tpu_custom_call.1} parent=1 // pred_region
      _
    $region21: #{tpu_custom_call.1} parent=1 // pred_fallthru
      _
    // Predicated region
    $region22: #{tpu_custom_call.1} parent=1 // pred_check
      _
    $region23: #{tpu_custom_call.1} parent=1 // pred_check_branch
      %23 = sbr.rel (0) target = $region25
    $region24: #{tpu_custom_call.1} parent=1 // pred_region
      _
    $region25: #{tpu_custom_call.1} parent=1 // pred_fallthru
      _
    %v25 = vld [vmem:[%s3] sm:$0xff]
    %v26 = vld [vmem:[%s3 + $0x8] sm:$0xff]
    %v27 = vld [vmem:[%s3 + $0x10] sm:$0xff]
    %v28 = vld [vmem:[%s3 + $0x18] sm:$0xff]
    %v29 = vld [vmem:[%s3 + $0x20] sm:$0xff]
    %v30 = vld [vmem:[%s3 + $0x28] sm:$0xff]
    %v31 = vld [vmem:[%s3 + $0x30] sm:$0xff]
    %v32 = vld [vmem:[%s3 + $0x38] sm:$0xff]
    %v33 = vld [vmem:[%s3 + $0x40] sm:$0xff]
    %v34 = vld [vmem:[%s3 + $0x48] sm:$0xff]
    %v35 = vld [vmem:[%s3 + $0x50] sm:$0xff]
    %v36 = vld [vmem:[%s3 + $0x58] sm:$0xff]
    %v37 = vld [vmem:[%s3 + $0x60] sm:$0xff]
    %v38 = vld [vmem:[%s3 + $0x68] sm:$0xff]
    %v39 = vld [vmem:[%s3 + $0x70] sm:$0xff]
    %v40 = vld [vmem:[%s3 + $0x78] sm:$0xff]
    %v41 = vld [vmem:[%s2] sm:$0xf]
    %v42 = vld [vmem:[%s2 + $0x4] sm:$0xf]
    %v43 = vld [vmem:[%s4] sm:$0xff]
    %v44 = vld [vmem:[%s4 + $0x8] sm:$0xff]
    %v45 = vld [vmem:[%s4 + $0x10] sm:$0xff]
    %v46 = vld [vmem:[%s4 + $0x18] sm:$0xff]
    %v47 = vld [vmem:[%s4 + $0x20] sm:$0xff]
    %v48 = vld [vmem:[%s4 + $0x28] sm:$0xff]
    %v49 = vld [vmem:[%s4 + $0x30] sm:$0xff]
    %v50 = vld [vmem:[%s4 + $0x38] sm:$0xff]
    %v51 = vld [vmem:[%s4 + $0x40] sm:$0xff]
    %v52 = vld [vmem:[%s4 + $0x48] sm:$0xff]
    %v53 = vld [vmem:[%s4 + $0x50] sm:$0xff]
    %v54 = vld [vmem:[%s4 + $0x58] sm:$0xff]
    %v55 = vld [vmem:[%s4 + $0x60] sm:$0xff]
    %v56 = vld [vmem:[%s4 + $0x68] sm:$0xff]
    %v57 = vld [vmem:[%s4 + $0x70] sm:$0xff]
    %v58 = vld [vmem:[%s4 + $0x78] sm:$0xff]
    %v59 = vld [vmem:[%s5] sm:$0xff]
    %v60 = vld [vmem:[%s0] sm:$0xff]
    %vm61 = vcmask 64512
    %v63 = vsel %vm61, %v25, 0
    %v66 = vsel %vm61, %v26, 0
    %v69 = vsel %vm61, %v27, 0
    %v72 = vsel %vm61, %v28, 0
    %v75 = vsel %vm61, %v29, 0
    %v78 = vsel %vm61, %v30, 0
    %v81 = vsel %vm61, %v31, 0
    %v84 = vsel %vm61, %v32, 0
    %v87 = vsel %vm61, %v33, 0
    %v90 = vsel %vm61, %v34, 0
    %v93 = vsel %vm61, %v35, 0
    %v96 = vsel %vm61, %v36, 0
    %v99 = vsel %vm61, %v37, 0
    %v102 = vsel %vm61, %v38, 0
    %v105 = vsel %vm61, %v39, 0
    %v108 = vsel %vm61, %v40, 0
    %110 = vmatprep.subr.mxu0 0.0
    %111 = vmatpush1.msra.mxu0 0.0
    %112 = vmatprep.subr.mxu0 0.0
    %113 = vmatpush1.msra.mxu0 0.0
    %114 = vmatprep.subr.mxu0 0.0
    %115 = vmatpush1.msra.mxu0 0.0
    %116 = vmatprep.subr.mxu0 0.0
    %117 = vmatpush1.msra.mxu0 0.0
    %118 = vmatprep.subr.mxu0 0.0
    %119 = vmatpush1.msra.mxu0 0.0
    %120 = vmatprep.subr.mxu0 0.0
    %121 = vmatpush1.msra.mxu0 0.0
    %122 = vmatprep.subr.mxu0 0.0
    %123 = vmatpush1.msra.mxu0 0.0
    %124 = vmatprep.subr.mxu0 0.0
    %125 = vmatpush1.msra.mxu0 0.0
    %126 = vmatprep.subr.mxu0 0.0
    %127 = vmatpush1.msra.mxu0 0.0
    %128 = vmatprep.subr.mxu0 0.0
    %129 = vmatpush1.msra.mxu0 0.0
    %130 = vmatprep.subr.mxu0 0.0
    %131 = vmatpush1.msra.mxu0 0.0
    %132 = vmatprep.subr.mxu0 0.0
    %133 = vmatpush1.msra.mxu0 0.0
    %134 = vmatprep.subr.mxu0 0.0
    %135 = vmatpush1.msra.mxu0 0.0
    %136 = vmatprep.subr.mxu0 0.0
    %137 = vmatpush1.msra.mxu0 0.0
    %138 = vmatprep.subr.mxu0 0.0
    %139 = vmatpush1.msra.mxu0 0.0
    %140 = vmatprep.subr.mxu0 0.0
    %141 = vmatpush1.msra.mxu0 %v60
    %142 = vmatprep.subr.mxu0 0.0
    %143 = vmatpush2.msra.mxu0 0.0
    %144 = vmatprep.subr.mxu0 0.0
    %145 = vmatpush2.msra.mxu0 0.0
    %146 = vmatprep.subr.mxu0 0.0
    %147 = vmatpush2.msra.mxu0 0.0
    %148 = vmatprep.subr.mxu0 0.0
    %149 = vmatpush2.msra.mxu0 0.0
    %150 = vmatprep.subr.mxu0 0.0
    %151 = vmatpush2.msra.mxu0 0.0
    %152 = vmatprep.subr.mxu0 0.0
    %153 = vmatpush2.msra.mxu0 0.0
    %154 = vmatprep.subr.mxu0 0.0
    %155 = vmatpush2.msra.mxu0 0.0
    %156 = vmatprep.subr.mxu0 0.0
    %157 = vmatpush2.msra.mxu0 0.0
    %158 = vmatprep.subr.mxu0 0.0
    %159 = vmatpush2.msra.mxu0 0.0
    %160 = vmatprep.subr.mxu0 0.0
    %161 = vmatpush2.msra.mxu0 0.0
    %162 = vmatprep.subr.mxu0 0.0
    %163 = vmatpush2.msra.mxu0 0.0
    %164 = vmatprep.subr.mxu0 0.0
    %165 = vmatpush2.msra.mxu0 0.0
    %166 = vmatprep.subr.mxu0 0.0
    %167 = vmatpush2.msra.mxu0 0.0
    %168 = vmatprep.subr.mxu0 0.0
    %169 = vmatpush2.msra.mxu0 0.0
    %170 = vmatprep.subr.mxu0 0.0
    %171 = vmatpush2.msra.mxu0 0.0
    %172 = vmatprep.subr.mxu0 0.0
    %173 = vmatpush2.msra.mxu0 0.0
    %174 = vmatprep.mubr.f32.mxu0 0.0
    %175 = vmatmul.mubr.f32.gmra.mxu0 %v63
    %v176 = vpop.f32.mrf.mxu0
    %v177 = vadd.f32 0.0, %v176
    %v178 = vpop.f32.mrf.mxu0
    %179 = vmatprep.mubr.f32.mxu0 0.0
    %180 = vmatmul.mubr.f32.gmra.mxu0 %v66
    %v181 = vpop.f32.mrf.mxu0
    %v182 = vadd.f32 0.0, %v181
    %v183 = vpop.f32.mrf.mxu0
    %184 = vmatprep.mubr.f32.mxu0 0.0
    %185 = vmatmul.mubr.f32.gmra.mxu0 %v69
    %v186 = vpop.f32.mrf.mxu0
    %v187 = vadd.f32 0.0, %v186
    %v188 = vpop.f32.mrf.mxu0
    %189 = vmatprep.mubr.f32.mxu0 0.0
    %190 = vmatmul.mubr.f32.gmra.mxu0 %v72
    %v191 = vpop.f32.mrf.mxu0
    %v192 = vadd.f32 0.0, %v191
    %v193 = vpop.f32.mrf.mxu0
    %194 = vmatprep.mubr.f32.mxu0 0.0
    %195 = vmatmul.mubr.f32.gmra.mxu0 %v75
    %v196 = vpop.f32.mrf.mxu0
    %v197 = vadd.f32 0.0, %v196
    %v198 = vpop.f32.mrf.mxu0
    %199 = vmatprep.mubr.f32.mxu0 0.0
    %200 = vmatmul.mubr.f32.gmra.mxu0 %v78
    %v201 = vpop.f32.mrf.mxu0
    %v202 = vadd.f32 0.0, %v201
    %v203 = vpop.f32.mrf.mxu0
    %204 = vmatprep.mubr.f32.mxu0 0.0
    %205 = vmatmul.mubr.f32.gmra.mxu0 %v81
    %v206 = vpop.f32.mrf.mxu0
    %v207 = vadd.f32 0.0, %v206
    %v208 = vpop.f32.mrf.mxu0
    %209 = vmatprep.mubr.f32.mxu0 0.0
    %210 = vmatmul.mubr.f32.gmra.mxu0 %v84
    %v211 = vpop.f32.mrf.mxu0
    %v212 = vadd.f32 0.0, %v211
    %v213 = vpop.f32.mrf.mxu0
    %214 = vmatprep.mubr.f32.mxu0 0.0
    %215 = vmatmul.mubr.f32.gmra.mxu0 %v87
    %v216 = vpop.f32.mrf.mxu0
    %v217 = vadd.f32 0.0, %v216
    %v218 = vpop.f32.mrf.mxu0
    %219 = vmatprep.mubr.f32.mxu0 0.0
    %220 = vmatmul.mubr.f32.gmra.mxu0 %v90
    %v221 = vpop.f32.mrf.mxu0
    %v222 = vadd.f32 0.0, %v221
    %v223 = vpop.f32.mrf.mxu0
    %224 = vmatprep.mubr.f32.mxu0 0.0
    %225 = vmatmul.mubr.f32.gmra.mxu0 %v93
    %v226 = vpop.f32.mrf.mxu0
    %v227 = vadd.f32 0.0, %v226
    %v228 = vpop.f32.mrf.mxu0
    %229 = vmatprep.mubr.f32.mxu0 0.0
    %230 = vmatmul.mubr.f32.gmra.mxu0 %v96
    %v231 = vpop.f32.mrf.mxu0
    %v232 = vadd.f32 0.0, %v231
    %v233 = vpop.f32.mrf.mxu0
    %234 = vmatprep.mubr.f32.mxu0 0.0
    %235 = vmatmul.mubr.f32.gmra.mxu0 %v99
    %v236 = vpop.f32.mrf.mxu0
    %v237 = vadd.f32 0.0, %v236
    %v238 = vpop.f32.mrf.mxu0
    %239 = vmatprep.mubr.f32.mxu0 0.0
    %240 = vmatmul.mubr.f32.gmra.mxu0 %v102
    %v241 = vpop.f32.mrf.mxu0
    %v242 = vadd.f32 0.0, %v241
    %v243 = vpop.f32.mrf.mxu0
    %244 = vmatprep.mubr.f32.mxu0 0.0
    %245 = vmatmul.mubr.f32.gmra.mxu0 %v105
    %v246 = vpop.f32.mrf.mxu0
    %v247 = vadd.f32 0.0, %v246
    %v248 = vpop.f32.mrf.mxu0
    %249 = vmatprep.mubr.f32.mxu0 0.0
    %250 = vmatmul.mubr.f32.gmra.mxu0 %v108
    %v251 = vpop.f32.mrf.mxu0
    %v252 = vadd.f32 0.0, %v251
    %v253 = vpop.f32.mrf.mxu0
    %254 = vdwg.mxu0
    %v255 = vmax.f32 %v177, 0.0
    %v256 = vmax.f32 %v182, 0.0
    %v257 = vmax.f32 %v187, 0.0
    %v258 = vmax.f32 %v192, 0.0
    %v259 = vmax.f32 %v197, 0.0
    %v260 = vmax.f32 %v202, 0.0
    %v261 = vmax.f32 %v207, 0.0
    %v262 = vmax.f32 %v212, 0.0
    %v263 = vmax.f32 %v217, 0.0
    %v264 = vmax.f32 %v222, 0.0
    %v265 = vmax.f32 %v227, 0.0
    %v266 = vmax.f32 %v232, 0.0
    %v267 = vmax.f32 %v237, 0.0
    %v268 = vmax.f32 %v242, 0.0
    %v269 = vmax.f32 %v247, 0.0
    %v270 = vmax.f32 %v252, 0.0
    %v271 = vld [vmem:[%s1] sm:$0xf]
    %v272 = vld [vmem:[%s1 + $0x4] sm:$0xf]
    %v273 = vld [vmem:[%s1 + $0x8] sm:$0xf]
    %v274 = vld [vmem:[%s1 + $0xc] sm:$0xf]
    %v275 = vld [vmem:[%s1 + $0x10] sm:$0xf]
    %v276 = vld [vmem:[%s1 + $0x14] sm:$0xf]
    %v277 = vld [vmem:[%s1 + $0x18] sm:$0xf]
    %v278 = vld [vmem:[%s1 + $0x1c] sm:$0xf]
    %v279 = vld [vmem:[%s1 + $0x20] sm:$0xf]
    %v280 = vld [vmem:[%s1 + $0x24] sm:$0xf]
    %v281 = vld [vmem:[%s1 + $0x28] sm:$0xf]
    %v282 = vld [vmem:[%s1 + $0x2c] sm:$0xf]
    %v283 = vld [vmem:[%s1 + $0x30] sm:$0xf]
    %v284 = vld [vmem:[%s1 + $0x34] sm:$0xf]
    %v285 = vld [vmem:[%s1 + $0x38] sm:$0xf]
    %v286 = vld [vmem:[%s1 + $0x3c] sm:$0xf]
    %v287 = vpack.c.bf16 %v256, %v255
    %v288 = vpack.c.bf16 %v258, %v257
    %v289 = vpack.c.bf16 %v260, %v259
    %v290 = vpack.c.bf16 %v262, %v261
    %v291 = vpack.c.bf16 %v264, %v263
    %v292 = vpack.c.bf16 %v266, %v265
    %v293 = vpack.c.bf16 %v268, %v267
    %v294 = vpack.c.bf16 %v270, %v269
    %296 = vset.pattern.permute.xlu0 0
    %297 = vperm.xlu0 %296, %v43
    %v298 = vpop.permute.xlu0 %297
    %301 = vset.pattern.permute.xlu0 0
    %302 = vperm.xlu0 %301, %v44
    %v303 = vpop.permute.xlu0 %302
    %306 = vset.pattern.permute.xlu0 0
    %307 = vperm.xlu0 %306, %v45
    %v308 = vpop.permute.xlu0 %307
    %311 = vset.pattern.permute.xlu0 0
    %312 = vperm.xlu0 %311, %v46
    %v313 = vpop.permute.xlu0 %312
    %316 = vset.pattern.permute.xlu0 0
    %317 = vperm.xlu0 %316, %v47
    %v318 = vpop.permute.xlu0 %317
    %321 = vset.pattern.permute.xlu0 0
    %322 = vperm.xlu0 %321, %v48
    %v323 = vpop.permute.xlu0 %322
    %326 = vset.pattern.permute.xlu0 0
    %327 = vperm.xlu0 %326, %v49
    %v328 = vpop.permute.xlu0 %327
    %331 = vset.pattern.permute.xlu0 0
    %332 = vperm.xlu0 %331, %v50
    %v333 = vpop.permute.xlu0 %332
    %336 = vset.pattern.permute.xlu0 0
    %337 = vperm.xlu0 %336, %v51
    %v338 = vpop.permute.xlu0 %337
    %341 = vset.pattern.permute.xlu0 0
    %342 = vperm.xlu0 %341, %v52
    %v343 = vpop.permute.xlu0 %342
    %346 = vset.pattern.permute.xlu0 0
    %347 = vperm.xlu0 %346, %v53
    %v348 = vpop.permute.xlu0 %347
    %351 = vset.pattern.permute.xlu0 0
    %352 = vperm.xlu0 %351, %v54
    %v353 = vpop.permute.xlu0 %352
    %356 = vset.pattern.permute.xlu0 0
    %357 = vperm.xlu0 %356, %v55
    %v358 = vpop.permute.xlu0 %357
    %361 = vset.pattern.permute.xlu0 0
    %362 = vperm.xlu0 %361, %v56
    %v363 = vpop.permute.xlu0 %362
    %366 = vset.pattern.permute.xlu0 0
    %367 = vperm.xlu0 %366, %v57
    %v368 = vpop.permute.xlu0 %367
    %371 = vset.pattern.permute.xlu0 0
    %372 = vperm.xlu0 %371, %v58
    %v373 = vpop.permute.xlu0 %372
    %v391 = vunpack.c.l.b16 %v271
    %v392 = vunpack.c.l.b16 %v272
    %v393 = vunpack.c.l.b16 %v273
    %v394 = vunpack.c.l.b16 %v274
    %v395 = vunpack.c.l.b16 %v275
    %v396 = vunpack.c.l.b16 %v276
    %v397 = vunpack.c.l.b16 %v277
    %v398 = vunpack.c.l.b16 %v278
    %v399 = vunpack.c.l.b16 %v279
    %v400 = vunpack.c.l.b16 %v280
    %v401 = vunpack.c.l.b16 %v281
    %v402 = vunpack.c.l.b16 %v282
    %v403 = vunpack.c.l.b16 %v283
    %v404 = vunpack.c.l.b16 %v284
    %v405 = vunpack.c.l.b16 %v285
    %v406 = vunpack.c.l.b16 %v286
    %v407 = vpack.c.b16 %v392, %v391
    %v408 = vpack.c.b16 %v394, %v393
    %v409 = vpack.c.b16 %v396, %v395
    %v410 = vpack.c.b16 %v398, %v397
    %v411 = vpack.c.b16 %v400, %v399
    %v412 = vpack.c.b16 %v402, %v401
    %v413 = vpack.c.b16 %v404, %v403
    %v414 = vpack.c.b16 %v406, %v405
    %423 = vmatprep.subr.bf16.mxu0 0
    %424 = vmatpush1.bf16.msra.mxu0 %v294
    %425 = vmatprep.subr.bf16.mxu0 0
    %426 = vmatpush1.bf16.msra.mxu0 %v293
    %427 = vmatprep.subr.bf16.mxu0 0
    %428 = vmatpush1.bf16.msra.mxu0 %v292
    %429 = vmatprep.subr.bf16.mxu0 0
    %430 = vmatpush1.bf16.msra.mxu0 %v291
    %431 = vmatprep.subr.bf16.mxu0 0
    %432 = vmatpush1.bf16.msra.mxu0 %v290
    %433 = vmatprep.subr.bf16.mxu0 0
    %434 = vmatpush1.bf16.msra.mxu0 %v289
    %435 = vmatprep.subr.bf16.mxu0 0
    %436 = vmatpush1.bf16.msra.mxu0 %v288
    %437 = vmatprep.subr.bf16.mxu0 0
    %438 = vmatpush1.bf16.msra.mxu0 %v287
    %439 = vmatprep.subr.bf16.mxu0 0
    %440 = vmatpush2.bf16.msra.mxu0 0
    %441 = vmatprep.subr.bf16.mxu0 0
    %442 = vmatpush2.bf16.msra.mxu0 0
    %443 = vmatprep.subr.bf16.mxu0 0
    %444 = vmatpush2.bf16.msra.mxu0 0
    %445 = vmatprep.subr.bf16.mxu0 0
    %446 = vmatpush2.bf16.msra.mxu0 0
    %447 = vmatprep.subr.bf16.mxu0 0
    %448 = vmatpush2.bf16.msra.mxu0 0
    %449 = vmatprep.subr.bf16.mxu0 0
    %450 = vmatpush2.bf16.msra.mxu0 0
    %451 = vmatprep.subr.bf16.mxu0 0
    %452 = vmatpush2.bf16.msra.mxu0 0
    %453 = vmatprep.subr.bf16.mxu0 0
    %454 = vmatpush2.bf16.msra.mxu0 0
    %455 = vmatprep.mubr.bf16.mxu0 0
    %456 = vmatmul.mubr.bf16.gmra.mxu0 %v407
    %v457 = vpop.f32.mrf.mxu0
    %v458 = vadd.f32 %v298, %v457
    %v459 = vpop.f32.mrf.mxu0
    %v460 = vpop.f32.mrf.mxu0
    %v461 = vadd.f32 %v303, %v460
    %v462 = vpop.f32.mrf.mxu0
    %463 = vmatprep.mubr.bf16.mxu0 0
    %464 = vmatmul.mubr.bf16.gmra.mxu0 %v408
    %v465 = vpop.f32.mrf.mxu0
    %v466 = vadd.f32 %v308, %v465
    %v467 = vpop.f32.mrf.mxu0
    %v468 = vpop.f32.mrf.mxu0
    %v469 = vadd.f32 %v313, %v468
    %v470 = vpop.f32.mrf.mxu0
    %471 = vmatprep.mubr.bf16.mxu0 0
    %472 = vmatmul.mubr.bf16.gmra.mxu0 %v409
    %v473 = vpop.f32.mrf.mxu0
    %v474 = vadd.f32 %v318, %v473
    %v475 = vpop.f32.mrf.mxu0
    %v476 = vpop.f32.mrf.mxu0
    %v477 = vadd.f32 %v323, %v476
    %v478 = vpop.f32.mrf.mxu0
    %479 = vmatprep.mubr.bf16.mxu0 0
    %480 = vmatmul.mubr.bf16.gmra.mxu0 %v410
    %v481 = vpop.f32.mrf.mxu0
    %v482 = vadd.f32 %v328, %v481
    %v483 = vpop.f32.mrf.mxu0
    %v484 = vpop.f32.mrf.mxu0
    %v485 = vadd.f32 %v333, %v484
    %v486 = vpop.f32.mrf.mxu0
    %487 = vmatprep.mubr.bf16.mxu0 0
    %488 = vmatmul.mubr.bf16.gmra.mxu0 %v411
    %v489 = vpop.f32.mrf.mxu0
    %v490 = vadd.f32 %v338, %v489
    %v491 = vpop.f32.mrf.mxu0
    %v492 = vpop.f32.mrf.mxu0
    %v493 = vadd.f32 %v343, %v492
    %v494 = vpop.f32.mrf.mxu0
    %495 = vmatprep.mubr.bf16.mxu0 0
    %496 = vmatmul.mubr.bf16.gmra.mxu0 %v412
    %v497 = vpop.f32.mrf.mxu0
    %v498 = vadd.f32 %v348, %v497
    %v499 = vpop.f32.mrf.mxu0
    %v500 = vpop.f32.mrf.mxu0
    %v501 = vadd.f32 %v353, %v500
    %v502 = vpop.f32.mrf.mxu0
    %503 = vmatprep.mubr.bf16.mxu0 0
    %504 = vmatmul.mubr.bf16.gmra.mxu0 %v413
    %v505 = vpop.f32.mrf.mxu0
    %v506 = vadd.f32 %v358, %v505
    %v507 = vpop.f32.mrf.mxu0
    %v508 = vpop.f32.mrf.mxu0
    %v509 = vadd.f32 %v363, %v508
    %v510 = vpop.f32.mrf.mxu0
    %511 = vmatprep.mubr.bf16.mxu0 0
    %512 = vmatmul.mubr.bf16.gmra.mxu0 %v414
    %v513 = vpop.f32.mrf.mxu0
    %v514 = vadd.f32 %v368, %v513
    %v515 = vpop.f32.mrf.mxu0
    %v516 = vpop.f32.mrf.mxu0
    %v517 = vadd.f32 %v373, %v516
    %v518 = vpop.f32.mrf.mxu0
    %519 = vdwg.mxu0
    %v520 = vmax.f32 %v458, 0.0
    %v521 = vmax.f32 %v461, 0.0
    %v522 = vmax.f32 %v466, 0.0
    %v523 = vmax.f32 %v469, 0.0
    %v524 = vmax.f32 %v474, 0.0
    %v525 = vmax.f32 %v477, 0.0
    %v526 = vmax.f32 %v482, 0.0
    %v527 = vmax.f32 %v485, 0.0
    %v528 = vmax.f32 %v490, 0.0
    %v529 = vmax.f32 %v493, 0.0
    %v530 = vmax.f32 %v498, 0.0
    %v531 = vmax.f32 %v501, 0.0
    %v532 = vmax.f32 %v506, 0.0
    %v533 = vmax.f32 %v509, 0.0
    %v534 = vmax.f32 %v514, 0.0
    %v535 = vmax.f32 %v517, 0.0
    %v536 = vpack.c.bf16 %v521, %v520
    %v537 = vpack.c.bf16 %v523, %v522
    %v538 = vpack.c.bf16 %v525, %v524
    %v539 = vpack.c.bf16 %v527, %v526
    %v540 = vpack.c.bf16 %v529, %v528
    %v541 = vpack.c.bf16 %v531, %v530
    %v542 = vpack.c.bf16 %v533, %v532
    %v543 = vpack.c.bf16 %v535, %v534
    %v546 = vunpack.c.l.b16 %v41
    %v547 = vunpack.c.l.b16 %v42
    %v548 = vpack.c.b16 %v547, %v546
    %550 = vmatprep.subr.bf16.mxu0 0
    %551 = vmatpush1.bf16.msra.mxu0 %v543
    %552 = vmatprep.subr.bf16.mxu0 0
    %553 = vmatpush1.bf16.msra.mxu0 %v542
    %554 = vmatprep.subr.bf16.mxu0 0
    %555 = vmatpush1.bf16.msra.mxu0 %v541
    %556 = vmatprep.subr.bf16.mxu0 0
    %557 = vmatpush1.bf16.msra.mxu0 %v540
    %558 = vmatprep.subr.bf16.mxu0 0
    %559 = vmatpush1.bf16.msra.mxu0 %v539
    %560 = vmatprep.subr.bf16.mxu0 0
    %561 = vmatpush1.bf16.msra.mxu0 %v538
    %562 = vmatprep.subr.bf16.mxu0 0
    %563 = vmatpush1.bf16.msra.mxu0 %v537
    %564 = vmatprep.subr.bf16.mxu0 0
    %565 = vmatpush1.bf16.msra.mxu0 %v536
    %566 = vmatprep.subr.bf16.mxu0 0
    %567 = vmatpush2.bf16.msra.mxu0 0
    %568 = vmatprep.subr.bf16.mxu0 0
    %569 = vmatpush2.bf16.msra.mxu0 0
    %570 = vmatprep.subr.bf16.mxu0 0
    %571 = vmatpush2.bf16.msra.mxu0 0
    %572 = vmatprep.subr.bf16.mxu0 0
    %573 = vmatpush2.bf16.msra.mxu0 0
    %574 = vmatprep.subr.bf16.mxu0 0
    %575 = vmatpush2.bf16.msra.mxu0 0
    %576 = vmatprep.subr.bf16.mxu0 0
    %577 = vmatpush2.bf16.msra.mxu0 0
    %578 = vmatprep.subr.bf16.mxu0 0
    %579 = vmatpush2.bf16.msra.mxu0 0
    %580 = vmatprep.subr.bf16.mxu0 0
    %581 = vmatpush2.bf16.msra.mxu0 0
    %582 = vmatprep.mubr.bf16.mxu0 0
    %583 = vmatmul.mubr.bf16.gmra.mxu0 %v548
    %v584 = vpop.f32.mrf.mxu0
    %v585 = vadd.f32 0.0, %v584
    %v586 = vpop.f32.mrf.mxu0
    %v587 = vpop.f32.mrf.mxu0
    %v588 = vpop.f32.mrf.mxu0
    %589 = vdwg.mxu0
    %591 = vset.pattern.permute.xlu0 0
    %592 = vperm.xlu0 %591, %v59
    %v593 = vpop.permute.xlu0 %592
    %v595 = vadd.f32 %v585, %v593
    %596 = vst [vmem:[#allocation2] sm:$0xff] %v595
    // Predicated region
    $region26: #{tpu_custom_call.1} parent=1 // pred_check
      _
    $region27: #{tpu_custom_call.1} parent=1 // pred_check_branch
      %598 = sbr.rel (0) target = $region29
    $region28: #{tpu_custom_call.1} parent=1 // pred_region
      %s600 = ssub.s32 128, 128
      %601 = vsyncadd [#allocation3], %s600
      %s603 = sshll.u32 [#allocation2], 4
      %s604 = int_to_ptr.vmem [resolvable:$true] %s603
      %606 = dma.vmem_to_hbm [thread:$0]  %s604, 128, %s6, [#allocation3]
    $region29: #{tpu_custom_call.1} parent=1 // pred_fallthru
      _
    // Predicated region
    $region30: #{tpu_custom_call.1} parent=1 // pred_check
      _
    $region31: #{tpu_custom_call.1} parent=1 // pred_check_branch
      %608 = sbr.rel (0) target = $region33
    $region32: #{tpu_custom_call.1} parent=1 // pred_region
      %609 = dma.done [#allocation3], 128
    $region33: #{tpu_custom_call.1} parent=1 // pred_fallthru
      _
    %610 = vsyncpa [#allocation3], 1

</llo_original>
